<compile_context>
chip_gen: v7x
topology: tpu7x:2x2x1
jax: 0.10.0
libtpu: 0.0.40
codegen_flags: <defaults>
</compile_context>

<pallas_src>
import functools

import jax
import jax.numpy as jnp
from jax.experimental import pallas as pl
from jax.experimental.pallas import tpu as pltpu


def _round_up(x, m):
    return ((x + m - 1) // m) * m


def _pick_batch_tile(n, max_nb=8):
    """Batch elements per grid step.

    Batch as much as possible to amortize the ~0.35us fixed per-step cost, but keep
    >= 2 grid steps when n >= 2 so both v7x TensorCores get work (no-op on the
    single-TC v5e/v6e).  Always returns a divisor of n.
    """
    divisors = [d for d in range(1, min(n, max_nb) + 1) if n % d == 0]
    two_steps = [d for d in divisors if n // d >= 2]
    return max(two_steps) if two_steps else max(divisors)


def _temporal_block_kernel(x_ref, w1_ref, b1_ref, w2_ref, b2_ref, o_ref,
                           xp_ref, y1_ref, *, K, D, P, L, L1, L2, NB, S):
    """Fused TemporalBlock forward for NB batch elements (channels-first).

    x_ref : (NB, C_in, L)    raw (unpadded) input                     (VMEM)
    w1_ref: (K, C_out, C_in) conv1 weight, per-tap layout             (VMEM)
    b1_ref: (C_out, 1)       conv1 bias (f32)                         (VMEM)
    w2_ref: (K, C_out, C_out) conv2 weight, per-tap layout            (VMEM)
    b2_ref: (C_out, 1)       conv2 bias (f32)                         (VMEM)
    o_ref : (NB, C_out, L2)  block output                             (VMEM)
    xp_ref: (C_in, NB*S)     scratch: per-segment zero-padded input   (VMEM)
    y1_ref: (C_out, NB*S)    scratch: per-segment zero-padded conv1 out (VMEM)

    Each batch element owns a lane segment of width S (S is a multiple of 128 and
    >= its padded conv inputs), so both convs run as K lane-dense matmuls over all
    NB segments at once; valid output columns of segment b are [b*S, b*S + L1/L2).
    """
    c_in = x_ref.shape[1]
    c_out = o_ref.shape[1]
    cdt = xp_ref.dtype                      # MXU operand / scratch dtype (bf16 default)
    reach = D * (K - 1)
    W = NB * S
    WC = W - reach                          # width of both tap-matmul outputs

    # ---- stage input: copy NB raw (C_in, L) slabs into the lane-concatenated,
    # per-segment zero-padded scratch.  Padding happens here (no XLA pad pass) and
    # only the two P-wide halos per segment are zero-stored, never the whole buffer.
    for b in range(NB):                     # static unroll; NB is small
        base = b * S
        if P > 0:
            xp_ref[:, base:base + P] = jnp.zeros((c_in, P), cdt)
            xp_ref[:, base + P + L:base + 2 * P + L] = jnp.zeros((c_in, P), cdt)
        xp_ref[:, base + P:base + P + L] = x_ref[b].astype(cdt)
    # Columns [base + L + 2P, base + S) are never read by a *valid* output column
    # (guaranteed by the wrapper's choice of S), so they are left untouched.

    # Validity mask over tap-matmul output columns: column u = b*S + t is a real
    # conv output iff t < L1.  Built as a static OR over segments (NB small) to
    # avoid vector integer div/mod.
    u = jax.lax.broadcasted_iota(jnp.int32, (1, WC), 1)
    valid = u < L1
    for b in range(1, NB):
        valid = valid | ((u >= b * S) & (u < b * S + L1))

    # ---- conv1 (dilated) + bias + ReLU: K lane-dense MXU matmuls
    #      (C_out x C_in) @ (C_in x WC), f32 accumulation, all NB segments at once.
    g1 = jnp.zeros((c_out, WC), jnp.float32)
    for k in range(K):
        g1 = g1 + jnp.dot(w1_ref[k], xp_ref[:, k * D:k * D + WC],
                          preferred_element_type=jnp.float32)
    h1 = jnp.maximum(g1 + b1_ref[...], 0.0)          # relu1 (dropout1 = id, eval)
    # Write shifted by +P so every segment carries its own zero padding for conv2;
    # segment-boundary columns are zeroed via the fused mask, and only the tiny
    # leading P-halo needs an explicit zero store.
    if P > 0:
        y1_ref[:, 0:P] = jnp.zeros((c_out, P), cdt)
    y1_ref[:, P:P + WC] = jnp.where(valid, h1, 0.0).astype(cdt)

    # ---- conv2 (dilated) + bias + ReLU -> per-segment lane-dense output stores.
    g2 = jnp.zeros((c_out, WC), jnp.float32)
    for k in range(K):
        g2 = g2 + jnp.dot(w2_ref[k], y1_ref[:, k * D:k * D + WC],
                          preferred_element_type=jnp.float32)
    h2 = jnp.maximum(g2 + b2_ref[...], 0.0)          # relu2 (dropout2 = id, eval)
    # Final nn.ReLU() of TemporalBlock.forward is a no-op on the already-ReLU'd h2
    # (and `res` / the downsample output is unused in the reference forward).
    for b in range(NB):
        o_ref[b, :, :] = h2[:, b * S:b * S + L2].astype(o_ref.dtype)


def temporal_block_forward(x, w1_v, w1_g, b1, w2_v, w2_g, b2, *,
                           kernel_size, stride, dilation, padding,
                           compute_dtype=jnp.bfloat16):
    """TemporalBlock forward (inference). x: (N, C_in, L) -> (N, C_out, L_out)."""
    # TODO(synk): stride > 1 not implemented (TCN always uses stride=1).
    assert stride == 1, "only stride=1 is supported"
    K, D, P = kernel_size, dilation, padding
    n, c_in, L = x.shape
    c_out = w1_v.shape[0]

    # weight_norm (PyTorch default dim=0): w = g * v / ||v|| over (in, k) per out ch.
    def _wn(v, g):
        v32, g32 = v.astype(jnp.float32), g.astype(jnp.float32)
        norm = jnp.sqrt(jnp.sum(v32 * v32, axis=(1, 2), keepdims=True))
        return g32 * v32 / norm

    # Per-tap channels-first layout (K, C_out, C_in): lhs of a lane-dense matmul.
    # Weight norm is computed in f32; MXU operands are cast to compute_dtype.
    w1_t = jnp.transpose(_wn(w1_v, w1_g), (2, 0, 1)).astype(compute_dtype)
    w2_t = jnp.transpose(_wn(w2_v, w2_g), (2, 0, 1)).astype(compute_dtype)
    b1_c = b1.reshape(c_out, 1).astype(jnp.float32)
    b2_c = b2.reshape(c_out, 1).astype(jnp.float32)

    # Output lengths for stride=1: each conv adds 2P and removes D*(K-1).
    reach = D * (K - 1)
    L_pad = L + 2 * P                 # conv1 padded input length
    L1 = L_pad - reach                # conv1 output length
    L1_pad = L1 + 2 * P               # conv2 padded input length
    L2 = L1_pad - reach               # conv2 / block output length
    assert L1 > 0 and L2 > 0

    NB = _pick_batch_tile(n)
    # Segment stride: lane-aligned (multiple of 128) and large enough that every
    # segment holds its padded conv inputs and no valid output column ever reads
    # past the freshly-written region of a neighbouring segment.
    S = _round_up(max(L_pad, L1_pad, L1 + P + reach), 128)
    W = NB * S

    cbytes = jnp.dtype(compute_dtype).itemsize
    vmem_need = (2 * NB * c_in * L * x.dtype.itemsize        # double-buffered in block
                 + 2 * NB * c_out * L2 * x.dtype.itemsize    # double-buffered out block
                 + 2 * K * c_out * (c_in + c_out) * cbytes   # weights
                 + 4 * c_out * 4                             # biases (f32)
                 + (c_in + c_out) * W * cbytes)              # scratch
    vmem_limit = int(min(64 << 20, max(8 << 20, 2 * vmem_need + (2 << 20))))
    # TODO(synk): for very long sequences (scratch ~ VMEM budget, esp. v7x 64 MiB),
    # add an L-tile grid axis with a (2P + reach) halo instead of keeping the whole
    # sequence resident.

    kernel = functools.partial(_temporal_block_kernel, K=K, D=D, P=P, L=L,
                               L1=L1, L2=L2, NB=NB, S=S)

    return pl.pallas_call(
        kernel,
        out_shape=jax.ShapeDtypeStruct((n, c_out, L2), x.dtype),
        grid_spec=pltpu.PrefetchScalarGridSpec(
            num_scalar_prefetch=0,
            grid=(n // NB,),
            in_specs=[
                pl.BlockSpec((NB, c_in, L), lambda i: (i, 0, 0)),
                pl.BlockSpec((K, c_out, c_in), lambda i: (0, 0, 0)),
                pl.BlockSpec((c_out, 1), lambda i: (0, 0)),
                pl.BlockSpec((K, c_out, c_out), lambda i: (0, 0, 0)),
                pl.BlockSpec((c_out, 1), lambda i: (0, 0)),
            ],
            out_specs=pl.BlockSpec((NB, c_out, L2), lambda i: (i, 0, 0)),
            scratch_shapes=[
                pltpu.VMEM((c_in, W), compute_dtype),    # per-segment padded input
                pltpu.VMEM((c_out, W), compute_dtype),   # per-segment padded conv1 out
            ],
        ),
        compiler_params=pltpu.CompilerParams(
            dimension_semantics=("parallel",),
            vmem_limit_bytes=vmem_limit,
        ),
    )(x, w1_t, b1_c, w2_t, b2_c)


if __name__ == "__main__":
    # Small shapes consistent with the module: batch=2, n_inputs=4, n_outputs=8,
    # kernel_size=3, stride=1, dilation=2, padding=(K-1)*dilation=4, seq_len=16.
    n, c_in, c_out, seq_len = 2, 4, 8, 16
    kernel_size, stride, dilation = 3, 1, 2
    padding = (kernel_size - 1) * dilation
    # dropout=0.2 -> identity in inference mode.
    # TODO(synk): training-mode dropout would need pltpu.prng_seed/prng_random_bits.

    key = jax.random.PRNGKey(0)
    ks = jax.random.split(key, 7)
    x = jax.random.normal(ks[0], (n, c_in, seq_len), jnp.float32)
    w1_v = 0.01 * jax.random.normal(ks[1], (c_out, c_in, kernel_size), jnp.float32)
    w1_g = 0.5 + jax.random.uniform(ks[2], (c_out, 1, 1), jnp.float32)
    b1 = 0.01 * jax.random.normal(ks[3], (c_out,), jnp.float32)
    w2_v = 0.01 * jax.random.normal(ks[4], (c_out, c_out, kernel_size), jnp.float32)
    w2_g = 0.5 + jax.random.uniform(ks[5], (c_out, 1, 1), jnp.float32)
    b2 = 0.01 * jax.random.normal(ks[6], (c_out,), jnp.float32)

    args = (x, w1_v, w1_g, b1, w2_v, w2_g, b2)
    kw = dict(kernel_size=kernel_size, stride=stride, dilation=dilation,
              padding=padding)

    y_bf16 = jax.block_until_ready(temporal_block_forward(*args, **kw))
    y_f32 = jax.block_until_ready(
        temporal_block_forward(*args, **kw, compute_dtype=jnp.float32))

    # ---- pure-JAX f32 reference of the PyTorch forward --------------------------
    def _wn_ref(v, g):
        norm = jnp.sqrt(jnp.sum(jnp.square(v), axis=(1, 2), keepdims=True))
        return g * v / norm

    def _conv_ref(xi, w, b):
        yi = jax.lax.conv_general_dilated(
            xi, w, window_strides=(stride,), padding=[(padding, padding)],
            rhs_dilation=(dilation,), dimension_numbers=("NCH", "OIH", "NCH"))
        return yi + b[None, :, None]

    out = jax.nn.relu(_conv_ref(x, _wn_ref(w1_v, w1_g), b1))    # conv1+relu1 (+dropout1: id)
    out = jax.nn.relu(_conv_ref(out, _wn_ref(w2_v, w2_g), b2))  # conv2+relu2 (+dropout2: id)
    ref = jax.nn.relu(out)                                      # final ReLU (`res` unused)

    assert y_f32.shape == ref.shape, (y_f32.shape, ref.shape)
    assert y_bf16.shape == ref.shape, (y_bf16.shape, ref.shape)
    err32 = float(jnp.max(jnp.abs(y_f32 - ref)))
    assert jnp.allclose(y_f32, ref, atol=1e-2, rtol=1e-2), f"f32 max_err={err32}"
    # bf16 MXU operands with f32 accumulation: tolerance sized for bf16 rounding.
    err16 = float(jnp.max(jnp.abs(y_bf16 - ref)))
    assert jnp.allclose(y_bf16, ref, atol=5e-2, rtol=5e-2), f"bf16 max_err={err16}"
    print("KERNEL_OK")
</pallas_src>

<mosaic_0001>
module attributes {stable_mosaic.version = 11 : i64} {
  func.func @_temporal_block_kernel(%arg0: i32, %arg1: memref<1x4x16xf32, #tpu.memory_space<vmem>>, %arg2: memref<3x8x4xbf16, #tpu.memory_space<vmem>>, %arg3: memref<8x1xf32, #tpu.memory_space<vmem>>, %arg4: memref<3x8x8xbf16, #tpu.memory_space<vmem>>, %arg5: memref<8x1xf32, #tpu.memory_space<vmem>>, %arg6: memref<1x8x24xf32, #tpu.memory_space<vmem>>, %arg7: memref<4x128xbf16, #tpu.memory_space<vmem>>, %arg8: memref<8x128xbf16, #tpu.memory_space<vmem>>) attributes {dimension_semantics = [#tpu.dimension_semantics<parallel>], iteration_bounds = array<i64: 2>, scalar_prefetch = 0 : i64, scratch_operands = 2 : i64, tpu.core_type = #tpu.core_type<tc>, window_params = [{transform_indices = @transform_0, window_bounds = array<i64: 1, 4, 16>}, {pipeline_mode = #tpu.pipeline_mode<synchronous>, transform_indices = @transform_1, window_bounds = array<i64: 3, 8, 4>}, {pipeline_mode = #tpu.pipeline_mode<synchronous>, transform_indices = @transform_2, window_bounds = array<i64: 8, 1>}, {pipeline_mode = #tpu.pipeline_mode<synchronous>, transform_indices = @transform_3, window_bounds = array<i64: 3, 8, 8>}, {pipeline_mode = #tpu.pipeline_mode<synchronous>, transform_indices = @transform_4, window_bounds = array<i64: 8, 1>}, {transform_indices = @transform_5, window_bounds = array<i64: 1, 8, 24>}]} {
    %cst = arith.constant 0.000000e+00 : bf16
    %0 = vector.broadcast %cst : bf16 to vector<4x4xbf16>
    %c0 = arith.constant 0 : index
    %c0_0 = arith.constant 0 : index
    %1 = vector.load %arg7[%c0, %c0_0] : memref<4x128xbf16, #tpu.memory_space<vmem>>, vector<4x4xbf16>
    tpu.vector_store %arg7[%c0, %c0_0], %0 {strides = array<i32>} : memref<4x128xbf16, #tpu.memory_space<vmem>>, vector<4x4xbf16>,
    %cst_1 = arith.constant 0.000000e+00 : bf16
    %2 = vector.broadcast %cst_1 : bf16 to vector<4x4xbf16>
    %c0_2 = arith.constant 0 : index
    %c20 = arith.constant 20 : index
    %3 = vector.load %arg7[%c0_2, %c20] : memref<4x128xbf16, #tpu.memory_space<vmem>>, vector<4x4xbf16>
    tpu.vector_store %arg7[%c0_2, %c20], %2 {strides = array<i32>} : memref<4x128xbf16, #tpu.memory_space<vmem>>, vector<4x4xbf16>,
    %c0_3 = arith.constant 0 : index
    %c0_4 = arith.constant 0 : index
    %c0_5 = arith.constant 0 : index
    %4 = vector.load %arg1[%c0_3, %c0_4, %c0_5] : memref<1x4x16xf32, #tpu.memory_space<vmem>>, vector<1x4x16xf32>
    %5 = vector.shape_cast %4 : vector<1x4x16xf32> to vector<4x16xf32>
    %6 = arith.truncf %5 : vector<4x16xf32> to vector<4x16xbf16>
    %c0_6 = arith.constant 0 : index
    %c4 = arith.constant 4 : index
    %7 = vector.load %arg7[%c0_6, %c4] : memref<4x128xbf16, #tpu.memory_space<vmem>>, vector<4x16xbf16>
    tpu.vector_store %arg7[%c0_6, %c4], %6 {strides = array<i32>} : memref<4x128xbf16, #tpu.memory_space<vmem>>, vector<4x16xbf16>,
    %8 = tpu.iota {dimensions = array<i32: 1>} : vector<1x124xi32>
    %c20_i32 = arith.constant 20 : i32
    %9 = vector.broadcast %c20_i32 : i32 to vector<1x124xi32>
    %10 = arith.cmpi slt, %8, %9 : vector<1x124xi32>
    %cst_7 = arith.constant 0.000000e+00 : f32
    %11 = vector.broadcast %cst_7 : f32 to vector<8x124xf32>
    %c0_8 = arith.constant 0 : index
    %c0_9 = arith.constant 0 : index
    %c0_10 = arith.constant 0 : index
    %12 = vector.load %arg2[%c0_8, %c0_9, %c0_10] : memref<3x8x4xbf16, #tpu.memory_space<vmem>>, vector<1x8x4xbf16>
    %13 = vector.shape_cast %12 : vector<1x8x4xbf16> to vector<8x4xbf16>
    %c0_11 = arith.constant 0 : index
    %c0_12 = arith.constant 0 : index
    %14 = vector.load %arg7[%c0_11, %c0_12] : memref<4x128xbf16, #tpu.memory_space<vmem>>, vector<4x124xbf16>
    %cst_13 = arith.constant dense<0.000000e+00> : vector<8x124xf32>
    %15 = tpu.matmul %13, %14, %cst_13 {dimension_numbers = #tpu.dot_dimension_numbers<[1], [0], [0], [1], [0, 0, 1, 1], [], []>} : vector<8x4xbf16>, vector<4x124xbf16>, vector<8x124xf32> -> vector<8x124xf32>
    %16 = arith.addf %11, %15 : vector<8x124xf32>
    %c1 = arith.constant 1 : index
    %c0_14 = arith.constant 0 : index
    %c0_15 = arith.constant 0 : index
    %17 = vector.load %arg2[%c1, %c0_14, %c0_15] : memref<3x8x4xbf16, #tpu.memory_space<vmem>>, vector<1x8x4xbf16>
    %18 = vector.shape_cast %17 : vector<1x8x4xbf16> to vector<8x4xbf16>
    %c0_16 = arith.constant 0 : index
    %c2 = arith.constant 2 : index
    %19 = vector.load %arg7[%c0_16, %c2] : memref<4x128xbf16, #tpu.memory_space<vmem>>, vector<4x124xbf16>
    %cst_17 = arith.constant dense<0.000000e+00> : vector<8x124xf32>
    %20 = tpu.matmul %18, %19, %cst_17 {dimension_numbers = #tpu.dot_dimension_numbers<[1], [0], [0], [1], [0, 0, 1, 1], [], []>} : vector<8x4xbf16>, vector<4x124xbf16>, vector<8x124xf32> -> vector<8x124xf32>
    %21 = arith.addf %16, %20 : vector<8x124xf32>
    %c2_18 = arith.constant 2 : index
    %c0_19 = arith.constant 0 : index
    %c0_20 = arith.constant 0 : index
    %22 = vector.load %arg2[%c2_18, %c0_19, %c0_20] : memref<3x8x4xbf16, #tpu.memory_space<vmem>>, vector<1x8x4xbf16>
    %23 = vector.shape_cast %22 : vector<1x8x4xbf16> to vector<8x4xbf16>
    %c0_21 = arith.constant 0 : index
    %c4_22 = arith.constant 4 : index
    %24 = vector.load %arg7[%c0_21, %c4_22] : memref<4x128xbf16, #tpu.memory_space<vmem>>, vector<4x124xbf16>
    %cst_23 = arith.constant dense<0.000000e+00> : vector<8x124xf32>
    %25 = tpu.matmul %23, %24, %cst_23 {dimension_numbers = #tpu.dot_dimension_numbers<[1], [0], [0], [1], [0, 0, 1, 1], [], []>} : vector<8x4xbf16>, vector<4x124xbf16>, vector<8x124xf32> -> vector<8x124xf32>
    %26 = arith.addf %21, %25 : vector<8x124xf32>
    %c0_24 = arith.constant 0 : index
    %c0_25 = arith.constant 0 : index
    %27 = vector.load %arg3[%c0_24, %c0_25] : memref<8x1xf32, #tpu.memory_space<vmem>>, vector<8x1xf32>
    %28 = vector.broadcast %27 : vector<8x1xf32> to vector<8x124xf32>
    %29 = arith.addf %26, %28 : vector<8x124xf32>
    %cst_26 = arith.constant 0.000000e+00 : f32
    %30 = vector.broadcast %cst_26 : f32 to vector<8x124xf32>
    %31 = arith.maximumf %29, %30 : vector<8x124xf32>
    %cst_27 = arith.constant 0.000000e+00 : bf16
    %32 = vector.broadcast %cst_27 : bf16 to vector<8x4xbf16>
    %c0_28 = arith.constant 0 : index
    %c0_29 = arith.constant 0 : index
    %33 = vector.load %arg8[%c0_28, %c0_29] : memref<8x128xbf16, #tpu.memory_space<vmem>>, vector<8x4xbf16>
    tpu.vector_store %arg8[%c0_28, %c0_29], %32 {strides = array<i32>} : memref<8x128xbf16, #tpu.memory_space<vmem>>, vector<8x4xbf16>,
    %cst_30 = arith.constant 0.000000e+00 : f32
    %34 = vector.shape_cast %10 : vector<1x124xi1> to vector<1x124xi1>
    %35 = vector.broadcast %34 : vector<1x124xi1> to vector<8x124xi1>
    %36 = vector.broadcast %cst_30 : f32 to vector<8x124xf32>
    %37 = arith.select %35, %31, %36 : vector<8x124xi1>, vector<8x124xf32>
    %38 = arith.truncf %37 : vector<8x124xf32> to vector<8x124xbf16>
    %c0_31 = arith.constant 0 : index
    %c4_32 = arith.constant 4 : index
    %39 = vector.load %arg8[%c0_31, %c4_32] : memref<8x128xbf16, #tpu.memory_space<vmem>>, vector<8x124xbf16>
    tpu.vector_store %arg8[%c0_31, %c4_32], %38 {strides = array<i32>} : memref<8x128xbf16, #tpu.memory_space<vmem>>, vector<8x124xbf16>,
    %cst_33 = arith.constant 0.000000e+00 : f32
    %40 = vector.broadcast %cst_33 : f32 to vector<8x124xf32>
    %c0_34 = arith.constant 0 : index
    %c0_35 = arith.constant 0 : index
    %c0_36 = arith.constant 0 : index
    %41 = vector.load %arg4[%c0_34, %c0_35, %c0_36] : memref<3x8x8xbf16, #tpu.memory_space<vmem>>, vector<1x8x8xbf16>
    %42 = vector.shape_cast %41 : vector<1x8x8xbf16> to vector<8x8xbf16>
    %c0_37 = arith.constant 0 : index
    %c0_38 = arith.constant 0 : index
    %43 = vector.load %arg8[%c0_37, %c0_38] : memref<8x128xbf16, #tpu.memory_space<vmem>>, vector<8x124xbf16>
    %cst_39 = arith.constant dense<0.000000e+00> : vector<8x124xf32>
    %44 = tpu.matmul %42, %43, %cst_39 {dimension_numbers = #tpu.dot_dimension_numbers<[1], [0], [0], [1], [0, 0, 1, 1], [], []>} : vector<8x8xbf16>, vector<8x124xbf16>, vector<8x124xf32> -> vector<8x124xf32>
    %45 = arith.addf %40, %44 : vector<8x124xf32>
    %c1_40 = arith.constant 1 : index
    %c0_41 = arith.constant 0 : index
    %c0_42 = arith.constant 0 : index
    %46 = vector.load %arg4[%c1_40, %c0_41, %c0_42] : memref<3x8x8xbf16, #tpu.memory_space<vmem>>, vector<1x8x8xbf16>
    %47 = vector.shape_cast %46 : vector<1x8x8xbf16> to vector<8x8xbf16>
    %c0_43 = arith.constant 0 : index
    %c2_44 = arith.constant 2 : index
    %48 = vector.load %arg8[%c0_43, %c2_44] : memref<8x128xbf16, #tpu.memory_space<vmem>>, vector<8x124xbf16>
    %cst_45 = arith.constant dense<0.000000e+00> : vector<8x124xf32>
    %49 = tpu.matmul %47, %48, %cst_45 {dimension_numbers = #tpu.dot_dimension_numbers<[1], [0], [0], [1], [0, 0, 1, 1], [], []>} : vector<8x8xbf16>, vector<8x124xbf16>, vector<8x124xf32> -> vector<8x124xf32>
    %50 = arith.addf %45, %49 : vector<8x124xf32>
    %c2_46 = arith.constant 2 : index
    %c0_47 = arith.constant 0 : index
    %c0_48 = arith.constant 0 : index
    %51 = vector.load %arg4[%c2_46, %c0_47, %c0_48] : memref<3x8x8xbf16, #tpu.memory_space<vmem>>, vector<1x8x8xbf16>
    %52 = vector.shape_cast %51 : vector<1x8x8xbf16> to vector<8x8xbf16>
    %c0_49 = arith.constant 0 : index
    %c4_50 = arith.constant 4 : index
    %53 = vector.load %arg8[%c0_49, %c4_50] : memref<8x128xbf16, #tpu.memory_space<vmem>>, vector<8x124xbf16>
    %cst_51 = arith.constant dense<0.000000e+00> : vector<8x124xf32>
    %54 = tpu.matmul %52, %53, %cst_51 {dimension_numbers = #tpu.dot_dimension_numbers<[1], [0], [0], [1], [0, 0, 1, 1], [], []>} : vector<8x8xbf16>, vector<8x124xbf16>, vector<8x124xf32> -> vector<8x124xf32>
    %55 = arith.addf %50, %54 : vector<8x124xf32>
    %c0_52 = arith.constant 0 : index
    %c0_53 = arith.constant 0 : index
    %56 = vector.load %arg5[%c0_52, %c0_53] : memref<8x1xf32, #tpu.memory_space<vmem>>, vector<8x1xf32>
    %57 = vector.broadcast %56 : vector<8x1xf32> to vector<8x124xf32>
    %58 = arith.addf %55, %57 : vector<8x124xf32>
    %cst_54 = arith.constant 0.000000e+00 : f32
    %59 = vector.broadcast %cst_54 : f32 to vector<8x124xf32>
    %60 = arith.maximumf %58, %59 : vector<8x124xf32>
    %61 = vector.extract_strided_slice %60 {offsets = [0, 0], sizes = [8, 24], strides = [1, 1]} : vector<8x124xf32> to vector<8x24xf32>
    %c0_55 = arith.constant 0 : index
    %c0_56 = arith.constant 0 : index
    %c0_57 = arith.constant 0 : index
    %62 = vector.load %arg6[%c0_55, %c0_56, %c0_57] : memref<1x8x24xf32, #tpu.memory_space<vmem>>, vector<1x8x24xf32>
    %63 = vector.shape_cast %62 : vector<1x8x24xf32> to vector<8x24xf32>
    %64 = vector.shape_cast %61 : vector<8x24xf32> to vector<1x8x24xf32>
    tpu.vector_store %arg6[%c0_55, %c0_56, %c0_57], %64 {strides = array<i32>} : memref<1x8x24xf32, #tpu.memory_space<vmem>>, vector<1x8x24xf32>,
    return
  }
  func.func @transform_0(%arg0: i32) -> (i32, i32, i32) {
    %c0_i32 = arith.constant 0 : i32
    %c0_i32_0 = arith.constant 0 : i32
    %c0_i32_1 = arith.constant 0 : i32
    return %arg0, %c0_i32, %c0_i32_0 : i32, i32, i32
  }
  func.func @transform_1(%arg0: i32) -> (i32, i32, i32) {
    %c0_i32 = arith.constant 0 : i32
    %c0_i32_0 = arith.constant 0 : i32
    %c0_i32_1 = arith.constant 0 : i32
    %c0_i32_2 = arith.constant 0 : i32
    return %c0_i32, %c0_i32_0, %c0_i32_1 : i32, i32, i32
  }
  func.func @transform_2(%arg0: i32) -> (i32, i32) {
    %c0_i32 = arith.constant 0 : i32
    %c0_i32_0 = arith.constant 0 : i32
    %c0_i32_1 = arith.constant 0 : i32
    return %c0_i32, %c0_i32_0 : i32, i32
  }
  func.func @transform_3(%arg0: i32) -> (i32, i32, i32) {
    %c0_i32 = arith.constant 0 : i32
    %c0_i32_0 = arith.constant 0 : i32
    %c0_i32_1 = arith.constant 0 : i32
    %c0_i32_2 = arith.constant 0 : i32
    return %c0_i32, %c0_i32_0, %c0_i32_1 : i32, i32, i32
  }
  func.func @transform_4(%arg0: i32) -> (i32, i32) {
    %c0_i32 = arith.constant 0 : i32
    %c0_i32_0 = arith.constant 0 : i32
    %c0_i32_1 = arith.constant 0 : i32
    return %c0_i32, %c0_i32_0 : i32, i32
  }
  func.func @transform_5(%arg0: i32) -> (i32, i32, i32) {
    %c0_i32 = arith.constant 0 : i32
    %c0_i32_0 = arith.constant 0 : i32
    %c0_i32_1 = arith.constant 0 : i32
    return %arg0, %c0_i32, %c0_i32_0 : i32, i32, i32
  }
}

</mosaic_0001>

<llo_original>
// kernel: tpu_custom_call.1
$region0: #{tpu_custom_call.1}
  #allocation0 [shape = 'u32[]', space=smem, size = 0x4, offset = 0x4, fixed_abs, tag = 'smem constant byte address 0x4 - core index']
  #allocation1 [shape = 'u32[144,128]{1,0:T(1,128)}', space=vmem, size = 0x12000, scoped, tag = 'internal scratch']
  #allocation2 [shape = 'bf16[4,128]{1,0:T(4,128)(2,1)}', space=vmem, size = 0x400, scoped, tag = 'scratch operand']
  #allocation3 [shape = 'bf16[8,128]{1,0:T(8,128)(2,1)}', space=vmem, size = 0x800, scoped, tag = 'scratch operand']
  %s0 = inlined_call_operand.vmem [shape: f32[2,4,16], index: 0, kind: input, shape index: {}]
  %s1 = inlined_call_operand.vmem [shape: bf16[3,8,4], index: 1, kind: input, shape index: {}]
  %s2 = inlined_call_operand.vmem [shape: f32[8,1], index: 2, kind: input, shape index: {}]
  %s3 = inlined_call_operand.vmem [shape: bf16[3,8,8], index: 3, kind: input, shape index: {}]
  %s4 = inlined_call_operand.vmem [shape: f32[8,1], index: 4, kind: input, shape index: {}]
  %s5 = inlined_call_operand.hbm [shape: f32[2,8,24], index: 5, kind: output, shape index: {}]
  %s6 = sld [smem:[#allocation0]]
  $region53: #{tpu_custom_call.1} parent=0
    _
  %s8 = ssub.s32 1, %s6
  %s9 = scalar_select 0, %s8, %s6
  $region1: #{tpu_custom_call.1} parent=0
    #allocation4 [shape = 'u8[8192]{0}', space=vmem, size = 0x2000, scoped, tag = 'output window, operand 0']
    #allocation5 [shape = 's32[2]{0}', space=sflag, size = 0x8, scoped, tag = 'scoped memory for tpu_custom_call.1']
    %10 = vsyncpa [#allocation5], 0
    %s11 = scalar_lea.sflag [#allocation5], 1
    %12 = vsyncpa %s11, 0
    loop: start=0, step=1, limit=4
    $region2: #{tpu_custom_call.1} parent=1 // loop_pre_header
      _
    $region3: #{tpu_custom_call.1} parent=1 // loop_header
      %s14 = sphi 0, %s18
      %p15 = scmp.ge.s32.totalorder %s14, 4
      %s24 = sphi 0, %s26
      %s27 = sphi 0, %s24
      %s28 = sphi 0, %s27
      %s44 = sphi 0, %s28
      %s48 = sphi 0, %s48
      %s50 = sphi 0, %s48
      %s51 = sphi 0, %s50
      %s65 = sphi 0, %s51
      %s69 = sphi 0, %s69
      %s71 = sphi 0, %s69
      %s72 = sphi 0, %s71
      %s86 = sphi 0, %s72
      %s90 = sphi 0, %s90
      %s92 = sphi 0, %s90
      %s93 = sphi 0, %s92
      %s107 = sphi 0, %s93
      %s111 = sphi 0, %s111
      %s113 = sphi 0, %s111
      %s114 = sphi 0, %s113
      %s128 = sphi 0, %s114
      %s134 = sphi 0, %s136
      %s137 = sphi 0, %s134
      %s138 = sphi 0, %s137
      %s154 = sphi 0, %s138
    $region4: #{tpu_custom_call.1} parent=1 // loop_header_branch
      %17 = sbr.rel (%p15) target = $region8
    $region5: #{tpu_custom_call.1} parent=1 // loop_body
      %s19 = ssub.s32 %s14, 1
      %s20 = ssub.s32 %s14, 2
      %s21 = sadd.s32 %s14, 1
      %s22 = ssub.s32 %s14, %s21
      %p23 = scmp.eq.s32.totalorder %s22, 0
      %s25 = sadd.s32 %s24, 1
      %s26 = scalar_select %p23, %s24, %s25
      %p29 = pneg %p23
      %p30 = scmp.eq.s32.totalorder %s14, 1
      %p31 = por %p29, %p30
      %p32 = scmp.ne.s32.totalorder %s24, %s27
      %p33 = scmp.eq.s32.totalorder %s14, 0
      %p34 = por %p32, %p33
      %p35 = scmp.ne.s32.totalorder %s24, %s27
      %p36 = scmp.eq.s32.totalorder %s19, 1
      %p37 = por %p35, %p36
      %p38 = scmp.ne.s32.totalorder %s27, %s28
      %p39 = scmp.eq.s32.totalorder %s19, 0
      %p40 = por %p38, %p39
      %p41 = scmp.ne.s32.totalorder %s27, %s28
      %p42 = scmp.eq.s32.totalorder %s20, 1
      %p43 = por %p41, %p42
      %p45 = scmp.ne.s32.totalorder %s28, %s44
      %p46 = scmp.eq.s32.totalorder %s20, 0
      %p47 = por %p45, %p46
      %s49 = sadd.s32 %s48, 1
      %p52 = scmp.eq.s32.totalorder %s14, 1
      %p53 = scmp.ne.s32.totalorder %s48, %s50
      %p54 = scmp.eq.s32.totalorder %s14, 0
      %p55 = por %p53, %p54
      %p56 = scmp.ne.s32.totalorder %s48, %s50
      %p57 = scmp.eq.s32.totalorder %s19, 1
      %p58 = por %p56, %p57
      %p59 = scmp.ne.s32.totalorder %s50, %s51
      %p60 = scmp.eq.s32.totalorder %s19, 0
      %p61 = por %p59, %p60
      %p62 = scmp.ne.s32.totalorder %s50, %s51
      %p63 = scmp.eq.s32.totalorder %s20, 1
      %p64 = por %p62, %p63
      %p66 = scmp.ne.s32.totalorder %s51, %s65
      %p67 = scmp.eq.s32.totalorder %s20, 0
      %p68 = por %p66, %p67
      %s70 = sadd.s32 %s69, 1
      %p73 = scmp.eq.s32.totalorder %s14, 1
      %p74 = scmp.ne.s32.totalorder %s69, %s71
      %p75 = scmp.eq.s32.totalorder %s14, 0
      %p76 = por %p74, %p75
      %p77 = scmp.ne.s32.totalorder %s69, %s71
      %p78 = scmp.eq.s32.totalorder %s19, 1
      %p79 = por %p77, %p78
      %p80 = scmp.ne.s32.totalorder %s71, %s72
      %p81 = scmp.eq.s32.totalorder %s19, 0
      %p82 = por %p80, %p81
      %p83 = scmp.ne.s32.totalorder %s71, %s72
      %p84 = scmp.eq.s32.totalorder %s20, 1
      %p85 = por %p83, %p84
      %p87 = scmp.ne.s32.totalorder %s72, %s86
      %p88 = scmp.eq.s32.totalorder %s20, 0
      %p89 = por %p87, %p88
      %s91 = sadd.s32 %s90, 1
      %p94 = scmp.eq.s32.totalorder %s14, 1
      %p95 = scmp.ne.s32.totalorder %s90, %s92
      %p96 = scmp.eq.s32.totalorder %s14, 0
      %p97 = por %p95, %p96
      %p98 = scmp.ne.s32.totalorder %s90, %s92
      %p99 = scmp.eq.s32.totalorder %s19, 1
      %p100 = por %p98, %p99
      %p101 = scmp.ne.s32.totalorder %s92, %s93
      %p102 = scmp.eq.s32.totalorder %s19, 0
      %p103 = por %p101, %p102
      %p104 = scmp.ne.s32.totalorder %s92, %s93
      %p105 = scmp.eq.s32.totalorder %s20, 1
      %p106 = por %p104, %p105
      %p108 = scmp.ne.s32.totalorder %s93, %s107
      %p109 = scmp.eq.s32.totalorder %s20, 0
      %p110 = por %p108, %p109
      %s112 = sadd.s32 %s111, 1
      %p115 = scmp.eq.s32.totalorder %s14, 1
      %p116 = scmp.ne.s32.totalorder %s111, %s113
      %p117 = scmp.eq.s32.totalorder %s14, 0
      %p118 = por %p116, %p117
      %p119 = scmp.ne.s32.totalorder %s111, %s113
      %p120 = scmp.eq.s32.totalorder %s19, 1
      %p121 = por %p119, %p120
      %p122 = scmp.ne.s32.totalorder %s113, %s114
      %p123 = scmp.eq.s32.totalorder %s19, 0
      %p124 = por %p122, %p123
      %p125 = scmp.ne.s32.totalorder %s113, %s114
      %p126 = scmp.eq.s32.totalorder %s20, 1
      %p127 = por %p125, %p126
      %p129 = scmp.ne.s32.totalorder %s114, %s128
      %p130 = scmp.eq.s32.totalorder %s20, 0
      %p131 = por %p129, %p130
      %s132 = ssub.s32 %s14, %s21
      %p133 = scmp.eq.s32.totalorder %s132, 0
      %s135 = sadd.s32 %s134, 1
      %s136 = scalar_select %p133, %s134, %s135
      %p139 = pneg %p133
      %p140 = scmp.eq.s32.totalorder %s14, 1
      %p141 = por %p139, %p140
      %p142 = scmp.ne.s32.totalorder %s134, %s137
      %p143 = scmp.eq.s32.totalorder %s14, 0
      %p144 = por %p142, %p143
      %p145 = scmp.ne.s32.totalorder %s134, %s137
      %p146 = scmp.eq.s32.totalorder %s19, 1
      %p147 = por %p145, %p146
      %p148 = scmp.ne.s32.totalorder %s137, %s138
      %p149 = scmp.eq.s32.totalorder %s19, 0
      %p150 = por %p148, %p149
      %p151 = scmp.ne.s32.totalorder %s137, %s138
      %p152 = scmp.eq.s32.totalorder %s20, 1
      %p153 = por %p151, %p152
      %p155 = scmp.ne.s32.totalorder %s138, %s154
      %p156 = scmp.eq.s32.totalorder %s20, 0
      %p157 = por %p155, %p156
      %p158 = scmp.le.s32.totalorder 1, %s14
      %p159 = scmp.lt.s32.totalorder %s14, 3
      %p160 = pnand %p158, %p159
      %p161 = pneg %p160
      // Predicated region
      $region9: #{tpu_custom_call.1} parent=5 // pred_check
        _
      $region10: #{tpu_custom_call.1} parent=5 // pred_check_branch
        %163 = sbr.rel (%p160) target = $region12
      $region11: #{tpu_custom_call.1} parent=5 // pred_region
        %s164 = ssub.s32 %s14, 1
        // Predicated region
        $region13: #{tpu_custom_call.1} parent=11 // pred_check
          %p165 = pneg %p61
        $region14: #{tpu_custom_call.1} parent=11 // pred_check_branch
          %167 = sbr.rel (%p165) target = $region16
        $region15: #{tpu_custom_call.1} parent=11 // pred_region
          _
        $region16: #{tpu_custom_call.1} parent=11 // pred_fallthru
          _
        // Predicated region
        $region17: #{tpu_custom_call.1} parent=11 // pred_check
          %p168 = pneg %p82
        $region18: #{tpu_custom_call.1} parent=11 // pred_check_branch
          %170 = sbr.rel (%p168) target = $region20
        $region19: #{tpu_custom_call.1} parent=11 // pred_region
          _
        $region20: #{tpu_custom_call.1} parent=11 // pred_fallthru
          _
        // Predicated region
        $region21: #{tpu_custom_call.1} parent=11 // pred_check
          %p171 = pneg %p103
        $region22: #{tpu_custom_call.1} parent=11 // pred_check_branch
          %173 = sbr.rel (%p171) target = $region24
        $region23: #{tpu_custom_call.1} parent=11 // pred_region
          _
        $region24: #{tpu_custom_call.1} parent=11 // pred_fallthru
          _
        // Predicated region
        $region25: #{tpu_custom_call.1} parent=11 // pred_check
          %p174 = pneg %p124
        $region26: #{tpu_custom_call.1} parent=11 // pred_check_branch
          %176 = sbr.rel (%p174) target = $region28
        $region27: #{tpu_custom_call.1} parent=11 // pred_region
          _
        $region28: #{tpu_custom_call.1} parent=11 // pred_fallthru
          _
      $region12: #{tpu_custom_call.1} parent=5 // pred_fallthru
        _
      %p177 = scmp.lt.s32.totalorder %s14, 2
      // Predicated region
      $region29: #{tpu_custom_call.1} parent=5 // pred_check
        %p178 = pneg %p177
      $region30: #{tpu_custom_call.1} parent=5 // pred_check_branch
        %180 = sbr.rel (%p178) target = $region32
      $region31: #{tpu_custom_call.1} parent=5 // pred_region
        // Predicated region
        $region33: #{tpu_custom_call.1} parent=31 // pred_check
          %p181 = pneg %p34
        $region34: #{tpu_custom_call.1} parent=31 // pred_check_branch
          %183 = sbr.rel (%p181) target = $region36
        $region35: #{tpu_custom_call.1} parent=31 // pred_region
          %p184 = scmp.lt.s32.totalorder %s14, 1
          %s185 = scalar_select %p184, %s14, 1
          %s186 = smul.addr %s185, 4
          %s187 = scalar_lea.vmem %s0, %s186
        $region36: #{tpu_custom_call.1} parent=31 // pred_fallthru
          _
      $region32: #{tpu_custom_call.1} parent=5 // pred_fallthru
        _
      %p188 = scmp.le.s32.totalorder 1, %s14
      %p189 = scmp.lt.s32.totalorder %s14, 3
      %p190 = pnand %p188, %p189
      %p191 = pneg %p190
      // Predicated region
      $region37: #{tpu_custom_call.1} parent=5 // pred_check
        _
      $region38: #{tpu_custom_call.1} parent=5 // pred_check_branch
        %193 = sbr.rel (%p190) target = $region40
      $region39: #{tpu_custom_call.1} parent=5 // pred_region
        %s194 = ssub.s32 %s14, 1
        %p195 = scmp.lt.s32.totalorder %s19, 1
        %s196 = scalar_select %p195, %s19, 1
        %s197 = smul.addr %s196, 4
        %s198 = scalar_lea.vmem %s0, %s197
        %p199 = pneg %p40
        %p200 = pneg %p37
        %p201 = pneg %p61
        %p202 = pneg %p58
        %p203 = pneg %p82
        %p204 = pneg %p79
        %p205 = pneg %p103
        %p206 = pneg %p100
        %p207 = pneg %p124
        %p208 = pneg %p121
        %p209 = pneg %p150
        %p210 = pneg %p147
        %s211 = sand.u32 %s137, 1
        %s212 = scalar_lea.sflag [#allocation5], %s211
        %s213 = sand.u32 %s137, 1
        %s214 = smul.addr %s213, 8
        %s215 = scalar_lea.vmem [#allocation4], %s214
        %p216 = scmp.lt.s32.totalorder %s19, 1
        %s217 = scalar_select %p216, %s19, 1
        %s218 = smul.addr %s217, 4
        %s219 = scalar_lea.vmem %s0, %s218
        %vm221 = vcmask 25600
        %222 = vst.msk [vmem:[#allocation2] sm:$0x3] %vm221, 0
        %vm223 = vcmask 189600
        %224 = vst.msk [vmem:[#allocation2] sm:$0x3] %vm223, 0
        %v225 = vld [vmem:[%s219] sm:$0xf]
        %v226 = vpack.c.bf16 %v225, %v225
        %v229 = vunpack.c.l.s4 1983009808
        %v230 = vunpack.c.0.s8 %v229
        %v231 = vlaneseq
        %v232 = vshrl.u32 %v231, 7
        %v233 = vsub.s32 %v230, %v232
        %v234 = vrot.slane %v226, %v233
        %235 = vrot.lane.b32.xlu0 %v234, 4
        %v236 = vpop.permute.xlu0 %235
        %vm238 = vcmask 156704
        %239 = vst.msk [vmem:[#allocation2] sm:$0x3] %vm238, %v236
        %v240 = vlaneseq
        %v241 = vand.u32 %v240, 127
        %vm242 = vcmp.lt.s32.totalorder %v241, 20
        %v243 = vld [vmem:[%s1] sm:$0xf]
        %v244 = vld [vmem:[#allocation2] sm:$0x3]
        %s245 = scalar_lea.vmem %s1, 4
        %v246 = vld [vmem:[%s245] sm:$0xf]
        %v249 = vunpack.c.l.s4 1983009808
        %v250 = vunpack.c.0.s8 %v249
        %v251 = vlaneseq
        %v252 = vshrl.u32 %v251, 7
        %v253 = vsub.s32 %v250, %v252
        %v254 = vrot.slane %v244, %v253
        %255 = vrot.lane.b32.xlu0 %v254, 126
        %v256 = vpop.permute.xlu0 %255
        %vm257 = vcmask 31744
        %v259 = vsel %vm257, %v246, 0
        %vm261 = vcmask 1041408
        %v263 = vsel %vm261, %v256, 0
        %265 = vmatprep.subr.bf16.mxu0 0
        %266 = vmatpush1.bf16.msra.mxu0 %v263
        %267 = vmatprep.subr.bf16.mxu0 0
        %268 = vmatpush1.bf16.msra.mxu0 0
        %269 = vmatprep.subr.bf16.mxu0 0
        %270 = vmatpush1.bf16.msra.mxu0 0
        %271 = vmatprep.subr.bf16.mxu0 0
        %272 = vmatpush1.bf16.msra.mxu0 0
        %273 = vmatprep.subr.bf16.mxu0 0
        %274 = vmatpush1.bf16.msra.mxu0 0
        %275 = vmatprep.subr.bf16.mxu0 0
        %276 = vmatpush1.bf16.msra.mxu0 0
        %277 = vmatprep.subr.bf16.mxu0 0
        %278 = vmatpush1.bf16.msra.mxu0 0
        %279 = vmatprep.subr.bf16.mxu0 0
        %280 = vmatpush1.bf16.msra.mxu0 0
        %281 = vmatprep.subr.bf16.mxu0 0
        %282 = vmatpush1.bf16.msra.mxu0 0
        %283 = vmatprep.subr.bf16.mxu0 0
        %284 = vmatpush1.bf16.msra.mxu0 0
        %285 = vmatprep.subr.bf16.mxu0 0
        %286 = vmatpush1.bf16.msra.mxu0 0
        %287 = vmatprep.subr.bf16.mxu0 0
        %288 = vmatpush1.bf16.msra.mxu0 0
        %289 = vmatprep.subr.bf16.mxu0 0
        %290 = vmatpush1.bf16.msra.mxu0 0
        %291 = vmatprep.subr.bf16.mxu0 0
        %292 = vmatpush1.bf16.msra.mxu0 0
        %293 = vmatprep.subr.bf16.mxu0 0
        %294 = vmatpush1.bf16.msra.mxu0 0
        %295 = vmatprep.subr.bf16.mxu0 0
        %296 = vmatpush1.bf16.msra.mxu0 0
        %297 = vmatprep.mubr.bf16.mxu0 0
        %298 = vmatmul.mubr.bf16.gmra.mrb[0].mxu0 %v259
        %v299 = vpop.f32.mrb[0].mxu0
        %v300 = vadd.f32 0.0, %v299
        %v301 = vpop.f32.mrb[0].mxu0
        %v302 = vpop.f32.mrb[0].mxu0
        %v303 = vpop.f32.mrb[0].mxu0
        %304 = vdwg.mxu0
        %v306 = vsel %vm257, %v243, 0
        %v309 = vsel %vm261, %v244, 0
        %311 = vmatprep.subr.bf16.mxu0 0
        %312 = vmatpush1.bf16.msra.mxu0 %v309
        %313 = vmatprep.subr.bf16.mxu0 0
        %314 = vmatpush1.bf16.msra.mxu0 0
        %315 = vmatprep.subr.bf16.mxu0 0
        %316 = vmatpush1.bf16.msra.mxu0 0
        %317 = vmatprep.subr.bf16.mxu0 0
        %318 = vmatpush1.bf16.msra.mxu0 0
        %319 = vmatprep.subr.bf16.mxu0 0
        %320 = vmatpush1.bf16.msra.mxu0 0
        %321 = vmatprep.subr.bf16.mxu0 0
        %322 = vmatpush1.bf16.msra.mxu0 0
        %323 = vmatprep.subr.bf16.mxu0 0
        %324 = vmatpush1.bf16.msra.mxu0 0
        %325 = vmatprep.subr.bf16.mxu0 0
        %326 = vmatpush1.bf16.msra.mxu0 0
        %327 = vmatprep.subr.bf16.mxu0 0
        %328 = vmatpush1.bf16.msra.mxu0 0
        %329 = vmatprep.subr.bf16.mxu0 0
        %330 = vmatpush1.bf16.msra.mxu0 0
        %331 = vmatprep.subr.bf16.mxu0 0
        %332 = vmatpush1.bf16.msra.mxu0 0
        %333 = vmatprep.subr.bf16.mxu0 0
        %334 = vmatpush1.bf16.msra.mxu0 0
        %335 = vmatprep.subr.bf16.mxu0 0
        %336 = vmatpush1.bf16.msra.mxu0 0
        %337 = vmatprep.subr.bf16.mxu0 0
        %338 = vmatpush1.bf16.msra.mxu0 0
        %339 = vmatprep.subr.bf16.mxu0 0
        %340 = vmatpush1.bf16.msra.mxu0 0
        %341 = vmatprep.subr.bf16.mxu0 0
        %342 = vmatpush1.bf16.msra.mxu0 0
        %343 = vmatprep.mubr.bf16.mxu0 0
        %344 = vmatmul.mubr.bf16.gmra.mrb[0].mxu0 %v306
        %v345 = vpop.f32.mrb[0].mxu0
        %v346 = vadd.f32 %v300, %v345
        %v347 = vpop.f32.mrb[0].mxu0
        %v348 = vpop.f32.mrb[0].mxu0
        %v349 = vpop.f32.mrb[0].mxu0
        %350 = vdwg.mxu0
        %s351 = scalar_lea.vmem %s1, 8
        %v352 = vld [vmem:[%s351] sm:$0xf]
        %v353 = vld [vmem:[#allocation2] sm:$0x3]
        %v356 = vunpack.c.l.s4 1983009808
        %v357 = vunpack.c.0.s8 %v356
        %v358 = vlaneseq
        %v359 = vshrl.u32 %v358, 7
        %v360 = vsub.s32 %v357, %v359
        %v361 = vrot.slane %v353, %v360
        %362 = vrot.lane.b32.xlu0 %v361, 124
        %v363 = vpop.permute.xlu0 %362
        %v365 = vsel %vm257, %v352, 0
        %v368 = vsel %vm261, %v363, 0
        %370 = vmatprep.subr.bf16.mxu0 0
        %371 = vmatpush1.bf16.msra.mxu0 %v368
        %372 = vmatprep.subr.bf16.mxu0 0
        %373 = vmatpush1.bf16.msra.mxu0 0
        %374 = vmatprep.subr.bf16.mxu0 0
        %375 = vmatpush1.bf16.msra.mxu0 0
        %376 = vmatprep.subr.bf16.mxu0 0
        %377 = vmatpush1.bf16.msra.mxu0 0
        %378 = vmatprep.subr.bf16.mxu0 0
        %379 = vmatpush1.bf16.msra.mxu0 0
        %380 = vmatprep.subr.bf16.mxu0 0
        %381 = vmatpush1.bf16.msra.mxu0 0
        %382 = vmatprep.subr.bf16.mxu0 0
        %383 = vmatpush1.bf16.msra.mxu0 0
        %384 = vmatprep.subr.bf16.mxu0 0
        %385 = vmatpush1.bf16.msra.mxu0 0
        %386 = vmatprep.subr.bf16.mxu0 0
        %387 = vmatpush1.bf16.msra.mxu0 0
        %388 = vmatprep.subr.bf16.mxu0 0
        %389 = vmatpush1.bf16.msra.mxu0 0
        %390 = vmatprep.subr.bf16.mxu0 0
        %391 = vmatpush1.bf16.msra.mxu0 0
        %392 = vmatprep.subr.bf16.mxu0 0
        %393 = vmatpush1.bf16.msra.mxu0 0
        %394 = vmatprep.subr.bf16.mxu0 0
        %395 = vmatpush1.bf16.msra.mxu0 0
        %396 = vmatprep.subr.bf16.mxu0 0
        %397 = vmatpush1.bf16.msra.mxu0 0
        %398 = vmatprep.subr.bf16.mxu0 0
        %399 = vmatpush1.bf16.msra.mxu0 0
        %400 = vmatprep.subr.bf16.mxu0 0
        %401 = vmatpush1.bf16.msra.mxu0 0
        %402 = vmatprep.mubr.bf16.mxu0 0
        %403 = vmatmul.mubr.bf16.gmra.mrb[0].mxu0 %v365
        %v404 = vpop.f32.mrb[0].mxu0
        %v405 = vadd.f32 0.0, %v404
        %v406 = vpop.f32.mrb[0].mxu0
        %v407 = vpop.f32.mrb[0].mxu0
        %v408 = vpop.f32.mrb[0].mxu0
        %409 = vdwg.mxu0
        %v410 = vadd.f32 %v346, %v405
        %v411 = vld [vmem:[%s2] sm:$0xff]
        %413 = vset.pattern.permute.xlu0 0
        %414 = vperm.xlu0 %413, %v411
        %v415 = vpop.permute.xlu0 %414
        %v417 = vadd.f32 %v410, %v415
        %v418 = vmax.f32 %v417, 0.0
        %vm419 = vcmask 27648
        %420 = vst.msk [vmem:[#allocation3] sm:$0xf] %vm419, 0
        %v421 = vsel %vm242, 1, 0
        %vm422 = vcmp.eq.s32.totalorder %v421, 1
        %v423 = vsel %vm422, %v418, 0.0
        %v424 = vpack.c.bf16 %v423, %v423
        %v426 = vunpack.c.l.b16 %v424
        %v427 = vpack.c.b16 %v426, %v426
        %428 = vrot.lane.b32.xlu0 %v427, 4
        %v429 = vpop.permute.xlu0 %428
        %vm431 = vcmask 1043488
        %432 = vst.msk [vmem:[#allocation3] sm:$0xf] %vm431, %v429
        %v433 = vld [vmem:[%s3] sm:$0xf]
        %v434 = vld [vmem:[#allocation3] sm:$0xf]
        %s435 = scalar_lea.vmem %s3, 4
        %v436 = vld [vmem:[%s435] sm:$0xf]
        %v438 = vunpack.c.l.b16 %v434
        %v439 = vpack.c.b16 %v438, %v438
        %440 = vrot.lane.b32.xlu0 %v439, 126
        %v441 = vpop.permute.xlu0 %440
        %vm442 = vcmask 64512
        %v444 = vsel %vm442, %v436, 0
        %vm446 = vcmask 1043456
        %v448 = vsel %vm446, %v441, 0
        %450 = vmatprep.subr.bf16.mxu0 0
        %451 = vmatpush1.bf16.msra.mxu0 %v448
        %452 = vmatprep.subr.bf16.mxu0 0
        %453 = vmatpush1.bf16.msra.mxu0 0
        %454 = vmatprep.subr.bf16.mxu0 0
        %455 = vmatpush1.bf16.msra.mxu0 0
        %456 = vmatprep.subr.bf16.mxu0 0
        %457 = vmatpush1.bf16.msra.mxu0 0
        %458 = vmatprep.subr.bf16.mxu0 0
        %459 = vmatpush1.bf16.msra.mxu0 0
        %460 = vmatprep.subr.bf16.mxu0 0
        %461 = vmatpush1.bf16.msra.mxu0 0
        %462 = vmatprep.subr.bf16.mxu0 0
        %463 = vmatpush1.bf16.msra.mxu0 0
        %464 = vmatprep.subr.bf16.mxu0 0
        %465 = vmatpush1.bf16.msra.mxu0 0
        %466 = vmatprep.subr.bf16.mxu0 0
        %467 = vmatpush1.bf16.msra.mxu0 0
        %468 = vmatprep.subr.bf16.mxu0 0
        %469 = vmatpush1.bf16.msra.mxu0 0
        %470 = vmatprep.subr.bf16.mxu0 0
        %471 = vmatpush1.bf16.msra.mxu0 0
        %472 = vmatprep.subr.bf16.mxu0 0
        %473 = vmatpush1.bf16.msra.mxu0 0
        %474 = vmatprep.subr.bf16.mxu0 0
        %475 = vmatpush1.bf16.msra.mxu0 0
        %476 = vmatprep.subr.bf16.mxu0 0
        %477 = vmatpush1.bf16.msra.mxu0 0
        %478 = vmatprep.subr.bf16.mxu0 0
        %479 = vmatpush1.bf16.msra.mxu0 0
        %480 = vmatprep.subr.bf16.mxu0 0
        %481 = vmatpush1.bf16.msra.mxu0 0
        %482 = vmatprep.mubr.bf16.mxu0 0
        %483 = vmatmul.mubr.bf16.gmra.mrb[0].mxu0 %v444
        %v484 = vpop.f32.mrb[0].mxu0
        %v485 = vadd.f32 0.0, %v484
        %v486 = vpop.f32.mrb[0].mxu0
        %v487 = vpop.f32.mrb[0].mxu0
        %v488 = vpop.f32.mrb[0].mxu0
        %489 = vdwg.mxu0
        %v491 = vsel %vm442, %v433, 0
        %v494 = vsel %vm446, %v434, 0
        %496 = vmatprep.subr.bf16.mxu0 0
        %497 = vmatpush1.bf16.msra.mxu0 %v494
        %498 = vmatprep.subr.bf16.mxu0 0
        %499 = vmatpush1.bf16.msra.mxu0 0
        %500 = vmatprep.subr.bf16.mxu0 0
        %501 = vmatpush1.bf16.msra.mxu0 0
        %502 = vmatprep.subr.bf16.mxu0 0
        %503 = vmatpush1.bf16.msra.mxu0 0
        %504 = vmatprep.subr.bf16.mxu0 0
        %505 = vmatpush1.bf16.msra.mxu0 0
        %506 = vmatprep.subr.bf16.mxu0 0
        %507 = vmatpush1.bf16.msra.mxu0 0
        %508 = vmatprep.subr.bf16.mxu0 0
        %509 = vmatpush1.bf16.msra.mxu0 0
        %510 = vmatprep.subr.bf16.mxu0 0
        %511 = vmatpush1.bf16.msra.mxu0 0
        %512 = vmatprep.subr.bf16.mxu0 0
        %513 = vmatpush1.bf16.msra.mxu0 0
        %514 = vmatprep.subr.bf16.mxu0 0
        %515 = vmatpush1.bf16.msra.mxu0 0
        %516 = vmatprep.subr.bf16.mxu0 0
        %517 = vmatpush1.bf16.msra.mxu0 0
        %518 = vmatprep.subr.bf16.mxu0 0
        %519 = vmatpush1.bf16.msra.mxu0 0
        %520 = vmatprep.subr.bf16.mxu0 0
        %521 = vmatpush1.bf16.msra.mxu0 0
        %522 = vmatprep.subr.bf16.mxu0 0
        %523 = vmatpush1.bf16.msra.mxu0 0
        %524 = vmatprep.subr.bf16.mxu0 0
        %525 = vmatpush1.bf16.msra.mxu0 0
        %526 = vmatprep.subr.bf16.mxu0 0
        %527 = vmatpush1.bf16.msra.mxu0 0
        %528 = vmatprep.mubr.bf16.mxu0 0
        %529 = vmatmul.mubr.bf16.gmra.mrb[0].mxu0 %v491
        %v530 = vpop.f32.mrb[0].mxu0
        %v531 = vadd.f32 %v485, %v530
        %v532 = vpop.f32.mrb[0].mxu0
        %v533 = vpop.f32.mrb[0].mxu0
        %v534 = vpop.f32.mrb[0].mxu0
        %535 = vdwg.mxu0
        %s536 = scalar_lea.vmem %s3, 8
        %v537 = vld [vmem:[%s536] sm:$0xf]
        %538 = vrot.lane.b32.xlu0 %v439, 124
        %v539 = vpop.permute.xlu0 %538
        %v541 = vsel %vm442, %v537, 0
        %v544 = vsel %vm446, %v539, 0
        %546 = vmatprep.subr.bf16.mxu0 0
        %547 = vmatpush1.bf16.msra.mxu0 %v544
        %548 = vmatprep.subr.bf16.mxu0 0
        %549 = vmatpush1.bf16.msra.mxu0 0
        %550 = vmatprep.subr.bf16.mxu0 0
        %551 = vmatpush1.bf16.msra.mxu0 0
        %552 = vmatprep.subr.bf16.mxu0 0
        %553 = vmatpush1.bf16.msra.mxu0 0
        %554 = vmatprep.subr.bf16.mxu0 0
        %555 = vmatpush1.bf16.msra.mxu0 0
        %556 = vmatprep.subr.bf16.mxu0 0
        %557 = vmatpush1.bf16.msra.mxu0 0
        %558 = vmatprep.subr.bf16.mxu0 0
        %559 = vmatpush1.bf16.msra.mxu0 0
        %560 = vmatprep.subr.bf16.mxu0 0
        %561 = vmatpush1.bf16.msra.mxu0 0
        %562 = vmatprep.subr.bf16.mxu0 0
        %563 = vmatpush1.bf16.msra.mxu0 0
        %564 = vmatprep.subr.bf16.mxu0 0
        %565 = vmatpush1.bf16.msra.mxu0 0
        %566 = vmatprep.subr.bf16.mxu0 0
        %567 = vmatpush1.bf16.msra.mxu0 0
        %568 = vmatprep.subr.bf16.mxu0 0
        %569 = vmatpush1.bf16.msra.mxu0 0
        %570 = vmatprep.subr.bf16.mxu0 0
        %571 = vmatpush1.bf16.msra.mxu0 0
        %572 = vmatprep.subr.bf16.mxu0 0
        %573 = vmatpush1.bf16.msra.mxu0 0
        %574 = vmatprep.subr.bf16.mxu0 0
        %575 = vmatpush1.bf16.msra.mxu0 0
        %576 = vmatprep.subr.bf16.mxu0 0
        %577 = vmatpush1.bf16.msra.mxu0 0
        %578 = vmatprep.mubr.bf16.mxu0 0
        %579 = vmatmul.mubr.bf16.gmra.mrb[0].mxu0 %v541
        %v580 = vpop.f32.mrb[0].mxu0
        %v581 = vadd.f32 0.0, %v580
        %v582 = vpop.f32.mrb[0].mxu0
        %v583 = vpop.f32.mrb[0].mxu0
        %v584 = vpop.f32.mrb[0].mxu0
        %585 = vdwg.mxu0
        %v586 = vadd.f32 %v531, %v581
        %v587 = vld [vmem:[%s4] sm:$0xff]
        %589 = vset.pattern.permute.xlu0 0
        %590 = vperm.xlu0 %589, %v587
        %v591 = vpop.permute.xlu0 %590
        %v593 = vadd.f32 %v586, %v591
        %v594 = vmax.f32 %v593, 0.0
        %vm595 = vcmask 195584
        %596 = vst.msk [vmem:[%s215] sm:$0xff] %vm595, %v594
        %s597 = sand.u32 %s137, 1
        %s598 = scalar_lea.sflag [#allocation5], %s597
        %s599 = sand.u32 %s137, 1
        %s600 = smul.addr %s599, 8
        %s601 = scalar_lea.vmem [#allocation4], %s600
        // Predicated region
        $region41: #{tpu_custom_call.1} parent=39 // pred_check
          %p602 = pneg %p147
        $region42: #{tpu_custom_call.1} parent=39 // pred_check_branch
          %604 = sbr.rel (%p602) target = $region44
        $region43: #{tpu_custom_call.1} parent=39 // pred_region
          %s606 = ssub.s32 128, 128
          %607 = vsyncadd %s598, %s606
          %s608 = smul.addr %s19, 128
          %s609 = scalar_lea.hbm %s5, %s608
          %s611 = sshll.u32 %s601, 4
          %s612 = int_to_ptr.vmem [resolvable:$true] %s611
          %614 = dma.vmem_to_hbm [thread:$0]  %s612, 128, %s609, %s598
        $region44: #{tpu_custom_call.1} parent=39 // pred_fallthru
          _
      $region40: #{tpu_custom_call.1} parent=5 // pred_fallthru
        _
      %p615 = scmp.le.s32.totalorder 2, %s14
      // Predicated region
      $region45: #{tpu_custom_call.1} parent=5 // pred_check
        %p616 = pneg %p615
      $region46: #{tpu_custom_call.1} parent=5 // pred_check_branch
        %618 = sbr.rel (%p616) target = $region48
      $region47: #{tpu_custom_call.1} parent=5 // pred_region
        %s619 = ssub.s32 %s14, 2
        // Predicated region
        $region49: #{tpu_custom_call.1} parent=47 // pred_check
          %p620 = pneg %p153
        $region50: #{tpu_custom_call.1} parent=47 // pred_check_branch
          %622 = sbr.rel (%p620) target = $region52
        $region51: #{tpu_custom_call.1} parent=47 // pred_region
          %s623 = sand.u32 %s138, 1
          %s624 = scalar_lea.sflag [#allocation5], %s623
          %s625 = sand.u32 %s138, 1
          %s626 = smul.addr %s625, 8
          %s627 = scalar_lea.vmem [#allocation4], %s626
          %628 = dma.done %s624, 128
        $region52: #{tpu_custom_call.1} parent=47 // pred_fallthru
          _
      $region48: #{tpu_custom_call.1} parent=5 // pred_fallthru
        _
    $region6: #{tpu_custom_call.1} parent=1 // loop_footer
      %s18 = sadd.s32 1, %s14
    $region7: #{tpu_custom_call.1} parent=1 // loop_footer_branch
      %13 = sbr.rel target = $region3
    $region8: #{tpu_custom_call.1} parent=1 // loop_exit
      _
    %629 = vsyncpa [#allocation5], 1
    %s630 = scalar_lea.sflag [#allocation5], 1
    %631 = vsyncpa %s630, 1

</llo_original>
